<compile_context>
chip_gen: v7x
topology: tpu7x:2x2x1
jax: 0.10.0
libtpu: 0.0.40
codegen_flags: <defaults>
</compile_context>

<pallas_src>
import functools

import jax
import jax.numpy as jnp
from jax.experimental import pallas as pl
from jax.experimental.pallas import tpu as pltpu


def _round_up(x, m):
    return ((x + m - 1) // m) * m


def _pick_batch_tile(B, L, target_rows=256):
    """Largest divisor of B with Bt*L <= target_rows, keeping >=2 grid steps."""
    best = 1
    for bt in range(1, B + 1):
        if B % bt:
            continue
        if bt * L > target_rows:
            continue
        if B >= 2 and B // bt < 2:
            continue
        best = bt
    return best


def resnet_block_kernel(x_ref, w1_ref, b1_ref, w2_ref, b2_ref, w3_ref, b3_ref,
                        gamma_ref, beta_ref, out_ref, pad_ref, *,
                        K, left, right, f_real, matmul_dtype):
    # x_ref:    (Bt, L, C1)      im2col'ed conv1 input, lane-padded (C1 = 128*)
    # w1_ref:   (C1, Fp)         conv1 im2col weight
    # w2/w3_ref:(K*Fp, Fp)       conv2/3 im2col weights
    # b*/gamma/beta: (1, Fp)
    # out_ref:  (Bt, L, Fp)      lane-dense output (Fp = 128*)
    # pad_ref:  VMEM (Bt, L+K-1, Fp) padded-activation scratch
    Bt, L, C1 = x_ref.shape
    Fp = out_ref.shape[-1]

    def mm(a, w_ref):
        return jnp.dot(a.astype(matmul_dtype), w_ref[...].astype(matmul_dtype),
                       preferred_element_type=jnp.float32)

    # Zero only the halo rows of the scratch (interior is always overwritten);
    # replaces the old full-buffer memsets (two full (Lpad,F) stores per conv).
    if left:
        pad_ref[:, :left, :] = jnp.zeros((Bt, left, Fp), jnp.float32)
    if right:
        pad_ref[:, left + L:, :] = jnp.zeros((Bt, right, Fp), jnp.float32)

    # ---- conv1 (residual branch): single im2col matmul ----
    x = x_ref[...].reshape(Bt * L, C1)
    residual = mm(x, w1_ref) + b1_ref[...]            # (Bt*L, Fp), pre-ReLU
    h = jnp.maximum(residual, 0.0)

    # ---- conv2 / conv3 + ReLU: one fused matmul each (contraction K*Fp) ----
    def conv_relu(h_flat, w_ref, b_ref):
        pad_ref[:, left:left + L, :] = h_flat.reshape(Bt, L, Fp)
        if K > 1:
            cols = jnp.concatenate(
                [pad_ref[:, k:k + L, :] for k in range(K)], axis=-1)
        else:
            cols = pad_ref[:, :L, :]
        a = mm(cols.reshape(Bt * L, K * Fp), w_ref) + b_ref[...]
        return jnp.maximum(a, 0.0)

    h = conv_relu(h, w2_ref, b2_ref)
    h = conv_relu(h, w3_ref, b3_ref)

    # ---- LayerNorm over the REAL channels (padded lanes are exactly zero,
    #      so lane-wide sums are exact; divide by f_real, not Fp) ----
    inv_f = jnp.float32(1.0 / f_real)
    s1 = jnp.sum(h, axis=-1, keepdims=True)
    s2 = jnp.sum(h * h, axis=-1, keepdims=True)
    mu = s1 * inv_f
    var = s2 * inv_f - mu * mu
    y = (h - mu) * jax.lax.rsqrt(var + 1e-5) * gamma_ref[...] + beta_ref[...]

    # ---- residual add + lane-dense store ----
    out_ref[...] = (y + residual).reshape(Bt, L, Fp).astype(out_ref.dtype)


def resnet_block_forward(x, params, *, matmul_dtype=jnp.float32):
    """x: (B, Cin, L) in PyTorch NCL layout.  Returns (B, F, L)."""
    w1, b1, w2, b2, w3, b3, gamma, beta = params
    B, Cin, L = x.shape
    F, _, K = w1.shape
    left = (K - 1) // 2
    right = (K - 1) - left
    Lpad = L + K - 1

    LANE = 128
    Fp = _round_up(F, LANE)          # lane-dense channel dim
    C1 = _round_up(K * Cin, LANE)    # lane-dense conv1 im2col contraction
    f32 = jnp.float32

    # ---- glue: channels-last + im2col for conv1, lane-padded ----
    x_lc = jnp.transpose(x, (0, 2, 1)).astype(f32)                 # (B, L, Cin)
    x_zp = jnp.pad(x_lc, ((0, 0), (left, right), (0, 0)))          # (B, Lpad, Cin)
    x_col = jnp.concatenate([x_zp[:, k:k + L, :] for k in range(K)], axis=-1)
    x_col = jnp.pad(x_col, ((0, 0), (0, 0), (0, C1 - K * Cin)))    # (B, L, C1)

    # conv1 weight (F, Cin, K) -> im2col matrix (K*Cin, F) -> padded (C1, Fp)
    w1_col = jnp.transpose(w1, (2, 1, 0)).reshape(K * Cin, F)
    w1_p = jnp.zeros((C1, Fp), f32).at[:K * Cin, :F].set(w1_col)

    def prep_w(w):  # (F, F, K) -> (K*Fp, Fp), matching the in-kernel im2col order
        wk = jnp.transpose(w, (2, 1, 0))                           # (K, Cin=F, F)
        wp = jnp.zeros((K, Fp, Fp), f32).at[:, :F, :F].set(wk)
        return wp.reshape(K * Fp, Fp)

    w2_p, w3_p = prep_w(w2), prep_w(w3)

    def pad_vec(v):
        return jnp.zeros((1, Fp), f32).at[0, :F].set(v)

    b1_p, b2_p, b3_p = pad_vec(b1), pad_vec(b2), pad_vec(b3)
    g_p, beta_p = pad_vec(gamma), pad_vec(beta)   # padded gamma lanes = 0

    Bt = _pick_batch_tile(B, L)
    grid = (B // Bt,)

    kernel = functools.partial(
        resnet_block_kernel, K=K, left=left, right=right, f_real=F,
        matmul_dtype=matmul_dtype)

    out_p = pl.pallas_call(
        kernel,
        out_shape=jax.ShapeDtypeStruct((B, L, Fp), f32),
        grid_spec=pltpu.PrefetchScalarGridSpec(
            num_scalar_prefetch=0,
            grid=grid,
            in_specs=[
                pl.BlockSpec((Bt, L, C1), lambda i: (i, 0, 0)),
                pl.BlockSpec((C1, Fp), lambda i: (0, 0)),
                pl.BlockSpec((1, Fp), lambda i: (0, 0)),
                pl.BlockSpec((K * Fp, Fp), lambda i: (0, 0)),
                pl.BlockSpec((1, Fp), lambda i: (0, 0)),
                pl.BlockSpec((K * Fp, Fp), lambda i: (0, 0)),
                pl.BlockSpec((1, Fp), lambda i: (0, 0)),
                pl.BlockSpec((1, Fp), lambda i: (0, 0)),
                pl.BlockSpec((1, Fp), lambda i: (0, 0)),
            ],
            out_specs=pl.BlockSpec((Bt, L, Fp), lambda i: (i, 0, 0)),
            scratch_shapes=[pltpu.VMEM((Bt, Lpad, Fp), jnp.float32)],
        ),
        compiler_params=pltpu.CompilerParams(
            dimension_semantics=("parallel",)),
    )(x_col, w1_p, b1_p, w2_p, b2_p, w3_p, b3_p, g_p, beta_p)

    # Slice off the lane padding and go back to NCL.
    return jnp.transpose(out_p[:, :, :F], (0, 2, 1))


# ----------------- pure-JAX reference (PyTorch semantics) -----------------
def _conv1d_same_ref(x, w, b):
    K = w.shape[-1]
    left = (K - 1) // 2
    right = (K - 1) - left
    xp = jnp.pad(x, ((0, 0), (0, 0), (left, right)))
    y = jax.lax.conv_general_dilated(
        xp, w, window_strides=(1,), padding='VALID',
        dimension_numbers=('NCH', 'OIH', 'NCH'))
    return y + b[None, :, None]


def reference_forward(x, params):
    w1, b1, w2, b2, w3, b3, gamma, beta = params
    residual = _conv1d_same_ref(x, w1, b1)
    h = jax.nn.relu(residual)
    h = jax.nn.relu(_conv1d_same_ref(h, w2, b2))
    h = jax.nn.relu(_conv1d_same_ref(h, w3, b3))
    ht = jnp.transpose(h, (0, 2, 1))
    mu = ht.mean(-1, keepdims=True)
    var = ((ht - mu) ** 2).mean(-1, keepdims=True)
    hn = (ht - mu) / jnp.sqrt(var + 1e-5)
    hn = hn * gamma + beta
    return jnp.transpose(hn, (0, 2, 1)) + residual


if __name__ == "__main__":
    B, Cin, L = 2, 4, 16     # batch, in_channels, sequence length
    F, K = 32, 3             # filter, kernel (odd => symmetric 'same' padding)

    key = jax.random.PRNGKey(0)
    ks = jax.random.split(key, 7)
    x = jax.random.normal(ks[0], (B, Cin, L), jnp.float32)

    # Deterministic synthetic parameters (same shapes as the nn.Module params).
    w1 = 0.2 * jax.random.normal(ks[1], (F, Cin, K), jnp.float32)
    b1 = 0.1 * jax.random.normal(ks[2], (F,), jnp.float32)
    w2 = 0.2 * jax.random.normal(ks[3], (F, F, K), jnp.float32)
    b2 = 0.1 * jax.random.normal(ks[4], (F,), jnp.float32)
    w3 = 0.2 * jax.random.normal(ks[5], (F, F, K), jnp.float32)
    b3 = 0.1 * jax.random.normal(ks[6], (F,), jnp.float32)
    gamma = jnp.ones((F,), jnp.float32)    # LayerNorm default affine params
    beta = jnp.zeros((F,), jnp.float32)
    params = (w1, b1, w2, b2, w3, b3, gamma, beta)

    out = jax.block_until_ready(resnet_block_forward(x, params))
    ref = reference_forward(x, params)

    assert out.shape == (B, F, L), out.shape
    assert jnp.allclose(out, ref, atol=1e-4, rtol=1e-4), \
        float(jnp.max(jnp.abs(out - ref)))
    print("KERNEL_OK")
</pallas_src>

<mosaic_0001>
module attributes {stable_mosaic.version = 11 : i64} {
  func.func @resnet_block_kernel(%arg0: i32, %arg1: memref<1x16x128xf32, #tpu.memory_space<vmem>>, %arg2: memref<128x128xf32, #tpu.memory_space<vmem>>, %arg3: memref<1x128xf32, #tpu.memory_space<vmem>>, %arg4: memref<384x128xf32, #tpu.memory_space<vmem>>, %arg5: memref<1x128xf32, #tpu.memory_space<vmem>>, %arg6: memref<384x128xf32, #tpu.memory_space<vmem>>, %arg7: memref<1x128xf32, #tpu.memory_space<vmem>>, %arg8: memref<1x128xf32, #tpu.memory_space<vmem>>, %arg9: memref<1x128xf32, #tpu.memory_space<vmem>>, %arg10: memref<1x16x128xf32, #tpu.memory_space<vmem>>, %arg11: memref<1x18x128xf32, #tpu.memory_space<vmem>>) attributes {dimension_semantics = [#tpu.dimension_semantics<parallel>], iteration_bounds = array<i64: 2>, scalar_prefetch = 0 : i64, scratch_operands = 1 : i64, tpu.core_type = #tpu.core_type<tc>, window_params = [{transform_indices = @transform_0, window_bounds = array<i64: 1, 16, 128>}, {pipeline_mode = #tpu.pipeline_mode<synchronous>, transform_indices = @transform_1, window_bounds = array<i64: 128, 128>}, {pipeline_mode = #tpu.pipeline_mode<synchronous>, transform_indices = @transform_2, window_bounds = array<i64: 1, 128>}, {pipeline_mode = #tpu.pipeline_mode<synchronous>, transform_indices = @transform_3, window_bounds = array<i64: 384, 128>}, {pipeline_mode = #tpu.pipeline_mode<synchronous>, transform_indices = @transform_4, window_bounds = array<i64: 1, 128>}, {pipeline_mode = #tpu.pipeline_mode<synchronous>, transform_indices = @transform_5, window_bounds = array<i64: 384, 128>}, {pipeline_mode = #tpu.pipeline_mode<synchronous>, transform_indices = @transform_6, window_bounds = array<i64: 1, 128>}, {pipeline_mode = #tpu.pipeline_mode<synchronous>, transform_indices = @transform_7, window_bounds = array<i64: 1, 128>}, {pipeline_mode = #tpu.pipeline_mode<synchronous>, transform_indices = @transform_8, window_bounds = array<i64: 1, 128>}, {transform_indices = @transform_9, window_bounds = array<i64: 1, 16, 128>}]} {
    %cst = arith.constant 0.000000e+00 : f32
    %0 = vector.broadcast %cst : f32 to vector<1x1x128xf32>
    %c0 = arith.constant 0 : index
    %c0_0 = arith.constant 0 : index
    %c0_1 = arith.constant 0 : index
    %1 = vector.load %arg11[%c0, %c0_0, %c0_1] : memref<1x18x128xf32, #tpu.memory_space<vmem>>, vector<1x1x128xf32>
    tpu.vector_store %arg11[%c0, %c0_0, %c0_1], %0 {strides = array<i32>} : memref<1x18x128xf32, #tpu.memory_space<vmem>>, vector<1x1x128xf32>,
    %cst_2 = arith.constant 0.000000e+00 : f32
    %2 = vector.broadcast %cst_2 : f32 to vector<1x1x128xf32>
    %c0_3 = arith.constant 0 : index
    %c17 = arith.constant 17 : index
    %c0_4 = arith.constant 0 : index
    %3 = vector.load %arg11[%c0_3, %c17, %c0_4] : memref<1x18x128xf32, #tpu.memory_space<vmem>>, vector<1x1x128xf32>
    tpu.vector_store %arg11[%c0_3, %c17, %c0_4], %2 {strides = array<i32>} : memref<1x18x128xf32, #tpu.memory_space<vmem>>, vector<1x1x128xf32>,
    %c0_5 = arith.constant 0 : index
    %c0_6 = arith.constant 0 : index
    %c0_7 = arith.constant 0 : index
    %4 = vector.load %arg1[%c0_5, %c0_6, %c0_7] : memref<1x16x128xf32, #tpu.memory_space<vmem>>, vector<1x16x128xf32>
    %5 = vector.shape_cast %4 : vector<1x16x128xf32> to vector<16x128xf32>
    %c0_8 = arith.constant 0 : index
    %c0_9 = arith.constant 0 : index
    %6 = vector.load %arg2[%c0_8, %c0_9] : memref<128x128xf32, #tpu.memory_space<vmem>>, vector<128x128xf32>
    %cst_10 = arith.constant dense<0.000000e+00> : vector<16x128xf32>
    %7 = tpu.matmul %5, %6, %cst_10 {dimension_numbers = #tpu.dot_dimension_numbers<[1], [0], [0], [1], [0, 0, 1, 1], [], []>} : vector<16x128xf32>, vector<128x128xf32>, vector<16x128xf32> -> vector<16x128xf32>
    %c0_11 = arith.constant 0 : index
    %c0_12 = arith.constant 0 : index
    %8 = vector.load %arg3[%c0_11, %c0_12] : memref<1x128xf32, #tpu.memory_space<vmem>>, vector<1x128xf32>
    %9 = vector.broadcast %8 : vector<1x128xf32> to vector<16x128xf32>
    %10 = arith.addf %7, %9 : vector<16x128xf32>
    %cst_13 = arith.constant 0.000000e+00 : f32
    %11 = vector.broadcast %cst_13 : f32 to vector<16x128xf32>
    %12 = arith.maximumf %10, %11 : vector<16x128xf32>
    %13 = vector.shape_cast %12 : vector<16x128xf32> to vector<1x16x128xf32>
    %c0_14 = arith.constant 0 : index
    %c1 = arith.constant 1 : index
    %c0_15 = arith.constant 0 : index
    %14 = vector.load %arg11[%c0_14, %c1, %c0_15] : memref<1x18x128xf32, #tpu.memory_space<vmem>>, vector<1x16x128xf32>
    tpu.vector_store %arg11[%c0_14, %c1, %c0_15], %13 {strides = array<i32>} : memref<1x18x128xf32, #tpu.memory_space<vmem>>, vector<1x16x128xf32>,
    %c0_16 = arith.constant 0 : index
    %c0_17 = arith.constant 0 : index
    %c0_18 = arith.constant 0 : index
    %15 = vector.load %arg11[%c0_16, %c0_17, %c0_18] : memref<1x18x128xf32, #tpu.memory_space<vmem>>, vector<1x16x128xf32>
    %c0_19 = arith.constant 0 : index
    %c1_20 = arith.constant 1 : index
    %c0_21 = arith.constant 0 : index
    %16 = vector.load %arg11[%c0_19, %c1_20, %c0_21] : memref<1x18x128xf32, #tpu.memory_space<vmem>>, vector<1x16x128xf32>
    %c0_22 = arith.constant 0 : index
    %c2 = arith.constant 2 : index
    %c0_23 = arith.constant 0 : index
    %17 = vector.load %arg11[%c0_22, %c2, %c0_23] : memref<1x18x128xf32, #tpu.memory_space<vmem>>, vector<1x16x128xf32>
    %18 = tpu.concatenate %15, %16, %17 in 2 : vector<1x16x128xf32>, vector<1x16x128xf32>, vector<1x16x128xf32> -> vector<1x16x384xf32>
    %19 = vector.shape_cast %18 : vector<1x16x384xf32> to vector<16x384xf32>
    %c0_24 = arith.constant 0 : index
    %c0_25 = arith.constant 0 : index
    %20 = vector.load %arg4[%c0_24, %c0_25] : memref<384x128xf32, #tpu.memory_space<vmem>>, vector<384x128xf32>
    %cst_26 = arith.constant dense<0.000000e+00> : vector<16x128xf32>
    %21 = tpu.matmul %19, %20, %cst_26 {dimension_numbers = #tpu.dot_dimension_numbers<[1], [0], [0], [1], [0, 0, 1, 1], [], []>} : vector<16x384xf32>, vector<384x128xf32>, vector<16x128xf32> -> vector<16x128xf32>
    %c0_27 = arith.constant 0 : index
    %c0_28 = arith.constant 0 : index
    %22 = vector.load %arg5[%c0_27, %c0_28] : memref<1x128xf32, #tpu.memory_space<vmem>>, vector<1x128xf32>
    %23 = vector.broadcast %22 : vector<1x128xf32> to vector<16x128xf32>
    %24 = arith.addf %21, %23 : vector<16x128xf32>
    %cst_29 = arith.constant 0.000000e+00 : f32
    %25 = vector.broadcast %cst_29 : f32 to vector<16x128xf32>
    %26 = arith.maximumf %24, %25 : vector<16x128xf32>
    %27 = vector.shape_cast %26 : vector<16x128xf32> to vector<1x16x128xf32>
    %c0_30 = arith.constant 0 : index
    %c1_31 = arith.constant 1 : index
    %c0_32 = arith.constant 0 : index
    %28 = vector.load %arg11[%c0_30, %c1_31, %c0_32] : memref<1x18x128xf32, #tpu.memory_space<vmem>>, vector<1x16x128xf32>
    tpu.vector_store %arg11[%c0_30, %c1_31, %c0_32], %27 {strides = array<i32>} : memref<1x18x128xf32, #tpu.memory_space<vmem>>, vector<1x16x128xf32>,
    %c0_33 = arith.constant 0 : index
    %c0_34 = arith.constant 0 : index
    %c0_35 = arith.constant 0 : index
    %29 = vector.load %arg11[%c0_33, %c0_34, %c0_35] : memref<1x18x128xf32, #tpu.memory_space<vmem>>, vector<1x16x128xf32>
    %c0_36 = arith.constant 0 : index
    %c1_37 = arith.constant 1 : index
    %c0_38 = arith.constant 0 : index
    %30 = vector.load %arg11[%c0_36, %c1_37, %c0_38] : memref<1x18x128xf32, #tpu.memory_space<vmem>>, vector<1x16x128xf32>
    %c0_39 = arith.constant 0 : index
    %c2_40 = arith.constant 2 : index
    %c0_41 = arith.constant 0 : index
    %31 = vector.load %arg11[%c0_39, %c2_40, %c0_41] : memref<1x18x128xf32, #tpu.memory_space<vmem>>, vector<1x16x128xf32>
    %32 = tpu.concatenate %29, %30, %31 in 2 : vector<1x16x128xf32>, vector<1x16x128xf32>, vector<1x16x128xf32> -> vector<1x16x384xf32>
    %33 = vector.shape_cast %32 : vector<1x16x384xf32> to vector<16x384xf32>
    %c0_42 = arith.constant 0 : index
    %c0_43 = arith.constant 0 : index
    %34 = vector.load %arg6[%c0_42, %c0_43] : memref<384x128xf32, #tpu.memory_space<vmem>>, vector<384x128xf32>
    %cst_44 = arith.constant dense<0.000000e+00> : vector<16x128xf32>
    %35 = tpu.matmul %33, %34, %cst_44 {dimension_numbers = #tpu.dot_dimension_numbers<[1], [0], [0], [1], [0, 0, 1, 1], [], []>} : vector<16x384xf32>, vector<384x128xf32>, vector<16x128xf32> -> vector<16x128xf32>
    %c0_45 = arith.constant 0 : index
    %c0_46 = arith.constant 0 : index
    %36 = vector.load %arg7[%c0_45, %c0_46] : memref<1x128xf32, #tpu.memory_space<vmem>>, vector<1x128xf32>
    %37 = vector.broadcast %36 : vector<1x128xf32> to vector<16x128xf32>
    %38 = arith.addf %35, %37 : vector<16x128xf32>
    %cst_47 = arith.constant 0.000000e+00 : f32
    %39 = vector.broadcast %cst_47 : f32 to vector<16x128xf32>
    %40 = arith.maximumf %38, %39 : vector<16x128xf32>
    %cst_48 = arith.constant dense<0.000000e+00> : vector<16xf32>
    %41 = vector.multi_reduction <add>, %40, %cst_48 [1] : vector<16x128xf32> to vector<16xf32>
    %42 = vector.shape_cast %41 : vector<16xf32> to vector<16x1xf32>
    %43 = arith.mulf %40, %40 : vector<16x128xf32>
    %cst_49 = arith.constant dense<0.000000e+00> : vector<16xf32>
    %44 = vector.multi_reduction <add>, %43, %cst_49 [1] : vector<16x128xf32> to vector<16xf32>
    %45 = vector.shape_cast %44 : vector<16xf32> to vector<16x1xf32>
    %cst_50 = arith.constant 3.125000e-02 : f32
    %46 = vector.broadcast %cst_50 : f32 to vector<16x1xf32>
    %47 = arith.mulf %42, %46 : vector<16x1xf32>
    %cst_51 = arith.constant 3.125000e-02 : f32
    %48 = vector.broadcast %cst_51 : f32 to vector<16x1xf32>
    %49 = arith.mulf %45, %48 : vector<16x1xf32>
    %50 = arith.mulf %47, %47 : vector<16x1xf32>
    %51 = arith.subf %49, %50 : vector<16x1xf32>
    %52 = vector.broadcast %47 : vector<16x1xf32> to vector<16x128xf32>
    %53 = arith.subf %40, %52 : vector<16x128xf32>
    %cst_52 = arith.constant 9.99999974E-6 : f32
    %54 = vector.broadcast %cst_52 : f32 to vector<16x1xf32>
    %55 = arith.addf %51, %54 : vector<16x1xf32>
    %56 = math.rsqrt %55 : vector<16x1xf32>
    %57 = vector.broadcast %56 : vector<16x1xf32> to vector<16x128xf32>
    %58 = arith.mulf %53, %57 : vector<16x128xf32>
    %c0_53 = arith.constant 0 : index
    %c0_54 = arith.constant 0 : index
    %59 = vector.load %arg8[%c0_53, %c0_54] : memref<1x128xf32, #tpu.memory_space<vmem>>, vector<1x128xf32>
    %60 = vector.broadcast %59 : vector<1x128xf32> to vector<16x128xf32>
    %61 = arith.mulf %58, %60 : vector<16x128xf32>
    %c0_55 = arith.constant 0 : index
    %c0_56 = arith.constant 0 : index
    %62 = vector.load %arg9[%c0_55, %c0_56] : memref<1x128xf32, #tpu.memory_space<vmem>>, vector<1x128xf32>
    %63 = vector.broadcast %62 : vector<1x128xf32> to vector<16x128xf32>
    %64 = arith.addf %61, %63 : vector<16x128xf32>
    %65 = arith.addf %64, %10 : vector<16x128xf32>
    %66 = vector.shape_cast %65 : vector<16x128xf32> to vector<1x16x128xf32>
    %c0_57 = arith.constant 0 : index
    %c0_58 = arith.constant 0 : index
    %c0_59 = arith.constant 0 : index
    %67 = vector.load %arg10[%c0_57, %c0_58, %c0_59] : memref<1x16x128xf32, #tpu.memory_space<vmem>>, vector<1x16x128xf32>
    tpu.vector_store %arg10[%c0_57, %c0_58, %c0_59], %66 {strides = array<i32>} : memref<1x16x128xf32, #tpu.memory_space<vmem>>, vector<1x16x128xf32>,
    return
  }
  func.func @transform_0(%arg0: i32) -> (i32, i32, i32) {
    %c0_i32 = arith.constant 0 : i32
    %c0_i32_0 = arith.constant 0 : i32
    %c0_i32_1 = arith.constant 0 : i32
    return %arg0, %c0_i32, %c0_i32_0 : i32, i32, i32
  }
  func.func @transform_1(%arg0: i32) -> (i32, i32) {
    %c0_i32 = arith.constant 0 : i32
    %c0_i32_0 = arith.constant 0 : i32
    %c0_i32_1 = arith.constant 0 : i32
    return %c0_i32, %c0_i32_0 : i32, i32
  }
  func.func @transform_2(%arg0: i32) -> (i32, i32) {
    %c0_i32 = arith.constant 0 : i32
    %c0_i32_0 = arith.constant 0 : i32
    %c0_i32_1 = arith.constant 0 : i32
    return %c0_i32, %c0_i32_0 : i32, i32
  }
  func.func @transform_3(%arg0: i32) -> (i32, i32) {
    %c0_i32 = arith.constant 0 : i32
    %c0_i32_0 = arith.constant 0 : i32
    %c0_i32_1 = arith.constant 0 : i32
    return %c0_i32, %c0_i32_0 : i32, i32
  }
  func.func @transform_4(%arg0: i32) -> (i32, i32) {
    %c0_i32 = arith.constant 0 : i32
    %c0_i32_0 = arith.constant 0 : i32
    %c0_i32_1 = arith.constant 0 : i32
    return %c0_i32, %c0_i32_0 : i32, i32
  }
  func.func @transform_5(%arg0: i32) -> (i32, i32) {
    %c0_i32 = arith.constant 0 : i32
    %c0_i32_0 = arith.constant 0 : i32
    %c0_i32_1 = arith.constant 0 : i32
    return %c0_i32, %c0_i32_0 : i32, i32
  }
  func.func @transform_6(%arg0: i32) -> (i32, i32) {
    %c0_i32 = arith.constant 0 : i32
    %c0_i32_0 = arith.constant 0 : i32
    %c0_i32_1 = arith.constant 0 : i32
    return %c0_i32, %c0_i32_0 : i32, i32
  }
  func.func @transform_7(%arg0: i32) -> (i32, i32) {
    %c0_i32 = arith.constant 0 : i32
    %c0_i32_0 = arith.constant 0 : i32
    %c0_i32_1 = arith.constant 0 : i32
    return %c0_i32, %c0_i32_0 : i32, i32
  }
  func.func @transform_8(%arg0: i32) -> (i32, i32) {
    %c0_i32 = arith.constant 0 : i32
    %c0_i32_0 = arith.constant 0 : i32
    %c0_i32_1 = arith.constant 0 : i32
    return %c0_i32, %c0_i32_0 : i32, i32
  }
  func.func @transform_9(%arg0: i32) -> (i32, i32, i32) {
    %c0_i32 = arith.constant 0 : i32
    %c0_i32_0 = arith.constant 0 : i32
    %c0_i32_1 = arith.constant 0 : i32
    return %arg0, %c0_i32, %c0_i32_0 : i32, i32, i32
  }
}

</mosaic_0001>

<llo_original>
// kernel: tpu_custom_call.1
$region0: #{tpu_custom_call.1}
  #allocation0 [shape = 'u32[]', space=smem, size = 0x4, offset = 0x4, fixed_abs, tag = 'smem constant byte address 0x4 - core index']
  #allocation1 [shape = 'u32[144,128]{1,0:T(1,128)}', space=vmem, size = 0x12000, scoped, tag = 'internal scratch']
  #allocation2 [shape = 'f32[1,18,128]{2,1,0:T(8,128)}', space=vmem, size = 0x3000, scoped, tag = 'scratch operand']
  %s0 = inlined_call_operand.hbm [shape: f32[2,16,128], index: 0, kind: input, shape index: {}]
  %s1 = inlined_call_operand.hbm [shape: f32[128,128], index: 1, kind: input, shape index: {}]
  %s2 = inlined_call_operand.vmem [shape: f32[1,128], index: 2, kind: input, shape index: {}]
  %s3 = inlined_call_operand.hbm [shape: f32[384,128], index: 3, kind: input, shape index: {}]
  %s4 = inlined_call_operand.vmem [shape: f32[1,128], index: 4, kind: input, shape index: {}]
  %s5 = inlined_call_operand.hbm [shape: f32[384,128], index: 5, kind: input, shape index: {}]
  %s6 = inlined_call_operand.vmem [shape: f32[1,128], index: 6, kind: input, shape index: {}]
  %s7 = inlined_call_operand.vmem [shape: f32[1,128], index: 7, kind: input, shape index: {}]
  %s8 = inlined_call_operand.vmem [shape: f32[1,128], index: 8, kind: input, shape index: {}]
  %s9 = inlined_call_operand.hbm [shape: f32[2,16,128], index: 9, kind: output, shape index: {}]
  %s10 = sld [smem:[#allocation0]]
  $region85: #{tpu_custom_call.1} parent=0
    _
  %s12 = ssub.s32 1, %s10
  %s13 = scalar_select 0, %s12, %s10
  $region1: #{tpu_custom_call.1} parent=0
    #allocation3 [shape = 'u8[16384]{0}', space=vmem, size = 0x4000, scoped, tag = 'input window, operand 0']
    #allocation4 [shape = 's32[2]{0}', space=sflag, size = 0x8, scoped, tag = 'scoped memory for tpu_custom_call.1']
    #allocation5 [shape = 's32[2]{0}', space=sflag, size = 0x8, scoped, tag = 'scoped memory for tpu_custom_call.1']
    #allocation6 [shape = 'u8[65536]{0}', space=vmem, size = 0x10000, scoped, tag = 'input window, operand 1, single buffered']
    #allocation7 [shape = 's32[1]{0}', space=sflag, size = 0x4, scoped, tag = 'scoped memory for tpu_custom_call.1']
    #allocation8 [shape = 'u8[196608]{0}', space=vmem, size = 0x30000, scoped, tag = 'input window, operand 3, single buffered']
    #allocation9 [shape = 'u8[196608]{0}', space=vmem, size = 0x30000, scoped, tag = 'input window, operand 5, single buffered']
    #allocation10 [shape = 's32[1]{0}', space=sflag, size = 0x4, scoped, tag = 'scoped memory for tpu_custom_call.1']
    #allocation11 [shape = 'u8[16384]{0}', space=vmem, size = 0x4000, scoped, tag = 'output window, operand 0']
    %14 = vsyncpa [#allocation4], 0
    %s15 = scalar_lea.sflag [#allocation4], 1
    %16 = vsyncpa %s15, 0
    %17 = vsyncpa [#allocation7], 0
    %18 = vsyncpa [#allocation10], 0
    %19 = vsyncpa [#allocation5], 0
    %s20 = scalar_lea.sflag [#allocation5], 1
    %21 = vsyncpa %s20, 0
    loop: start=0, step=1, limit=4
    $region2: #{tpu_custom_call.1} parent=1 // loop_pre_header
      _
    $region3: #{tpu_custom_call.1} parent=1 // loop_header
      %s23 = sphi 0, %s27
      %p24 = scmp.ge.s32.totalorder %s23, 4
      %s33 = sphi 0, %s35
      %s36 = sphi 0, %s33
      %s37 = sphi 0, %s36
      %s53 = sphi 0, %s37
      %s57 = sphi 0, %s57
      %s59 = sphi 0, %s57
      %s60 = sphi 0, %s59
      %s74 = sphi 0, %s60
      %s78 = sphi 0, %s78
      %s80 = sphi 0, %s78
      %s81 = sphi 0, %s80
      %s95 = sphi 0, %s81
      %s99 = sphi 0, %s99
      %s101 = sphi 0, %s99
      %s102 = sphi 0, %s101
      %s116 = sphi 0, %s102
      %s120 = sphi 0, %s120
      %s122 = sphi 0, %s120
      %s123 = sphi 0, %s122
      %s137 = sphi 0, %s123
      %s141 = sphi 0, %s141
      %s143 = sphi 0, %s141
      %s144 = sphi 0, %s143
      %s158 = sphi 0, %s144
      %s162 = sphi 0, %s162
      %s164 = sphi 0, %s162
      %s165 = sphi 0, %s164
      %s179 = sphi 0, %s165
      %s183 = sphi 0, %s183
      %s185 = sphi 0, %s183
      %s186 = sphi 0, %s185
      %s200 = sphi 0, %s186
      %s204 = sphi 0, %s204
      %s206 = sphi 0, %s204
      %s207 = sphi 0, %s206
      %s221 = sphi 0, %s207
      %s227 = sphi 0, %s229
      %s230 = sphi 0, %s227
      %s231 = sphi 0, %s230
      %s247 = sphi 0, %s231
    $region4: #{tpu_custom_call.1} parent=1 // loop_header_branch
      %26 = sbr.rel (%p24) target = $region8
    $region5: #{tpu_custom_call.1} parent=1 // loop_body
      %s28 = ssub.s32 %s23, 1
      %s29 = ssub.s32 %s23, 2
      %s30 = sadd.s32 %s23, 1
      %s31 = ssub.s32 %s23, %s30
      %p32 = scmp.eq.s32.totalorder %s31, 0
      %s34 = sadd.s32 %s33, 1
      %s35 = scalar_select %p32, %s33, %s34
      %p38 = pneg %p32
      %p39 = scmp.eq.s32.totalorder %s23, 1
      %p40 = por %p38, %p39
      %p41 = scmp.ne.s32.totalorder %s33, %s36
      %p42 = scmp.eq.s32.totalorder %s23, 0
      %p43 = por %p41, %p42
      %p44 = scmp.ne.s32.totalorder %s33, %s36
      %p45 = scmp.eq.s32.totalorder %s28, 1
      %p46 = por %p44, %p45
      %p47 = scmp.ne.s32.totalorder %s36, %s37
      %p48 = scmp.eq.s32.totalorder %s28, 0
      %p49 = por %p47, %p48
      %p50 = scmp.ne.s32.totalorder %s36, %s37
      %p51 = scmp.eq.s32.totalorder %s29, 1
      %p52 = por %p50, %p51
      %p54 = scmp.ne.s32.totalorder %s37, %s53
      %p55 = scmp.eq.s32.totalorder %s29, 0
      %p56 = por %p54, %p55
      %s58 = sadd.s32 %s57, 1
      %p61 = scmp.eq.s32.totalorder %s23, 1
      %p62 = scmp.ne.s32.totalorder %s57, %s59
      %p63 = scmp.eq.s32.totalorder %s23, 0
      %p64 = por %p62, %p63
      %p65 = scmp.ne.s32.totalorder %s57, %s59
      %p66 = scmp.eq.s32.totalorder %s28, 1
      %p67 = por %p65, %p66
      %p68 = scmp.ne.s32.totalorder %s59, %s60
      %p69 = scmp.eq.s32.totalorder %s28, 0
      %p70 = por %p68, %p69
      %p71 = scmp.ne.s32.totalorder %s59, %s60
      %p72 = scmp.eq.s32.totalorder %s29, 1
      %p73 = por %p71, %p72
      %p75 = scmp.ne.s32.totalorder %s60, %s74
      %p76 = scmp.eq.s32.totalorder %s29, 0
      %p77 = por %p75, %p76
      %s79 = sadd.s32 %s78, 1
      %p82 = scmp.eq.s32.totalorder %s23, 1
      %p83 = scmp.ne.s32.totalorder %s78, %s80
      %p84 = scmp.eq.s32.totalorder %s23, 0
      %p85 = por %p83, %p84
      %p86 = scmp.ne.s32.totalorder %s78, %s80
      %p87 = scmp.eq.s32.totalorder %s28, 1
      %p88 = por %p86, %p87
      %p89 = scmp.ne.s32.totalorder %s80, %s81
      %p90 = scmp.eq.s32.totalorder %s28, 0
      %p91 = por %p89, %p90
      %p92 = scmp.ne.s32.totalorder %s80, %s81
      %p93 = scmp.eq.s32.totalorder %s29, 1
      %p94 = por %p92, %p93
      %p96 = scmp.ne.s32.totalorder %s81, %s95
      %p97 = scmp.eq.s32.totalorder %s29, 0
      %p98 = por %p96, %p97
      %s100 = sadd.s32 %s99, 1
      %p103 = scmp.eq.s32.totalorder %s23, 1
      %p104 = scmp.ne.s32.totalorder %s99, %s101
      %p105 = scmp.eq.s32.totalorder %s23, 0
      %p106 = por %p104, %p105
      %p107 = scmp.ne.s32.totalorder %s99, %s101
      %p108 = scmp.eq.s32.totalorder %s28, 1
      %p109 = por %p107, %p108
      %p110 = scmp.ne.s32.totalorder %s101, %s102
      %p111 = scmp.eq.s32.totalorder %s28, 0
      %p112 = por %p110, %p111
      %p113 = scmp.ne.s32.totalorder %s101, %s102
      %p114 = scmp.eq.s32.totalorder %s29, 1
      %p115 = por %p113, %p114
      %p117 = scmp.ne.s32.totalorder %s102, %s116
      %p118 = scmp.eq.s32.totalorder %s29, 0
      %p119 = por %p117, %p118
      %s121 = sadd.s32 %s120, 1
      %p124 = scmp.eq.s32.totalorder %s23, 1
      %p125 = scmp.ne.s32.totalorder %s120, %s122
      %p126 = scmp.eq.s32.totalorder %s23, 0
      %p127 = por %p125, %p126
      %p128 = scmp.ne.s32.totalorder %s120, %s122
      %p129 = scmp.eq.s32.totalorder %s28, 1
      %p130 = por %p128, %p129
      %p131 = scmp.ne.s32.totalorder %s122, %s123
      %p132 = scmp.eq.s32.totalorder %s28, 0
      %p133 = por %p131, %p132
      %p134 = scmp.ne.s32.totalorder %s122, %s123
      %p135 = scmp.eq.s32.totalorder %s29, 1
      %p136 = por %p134, %p135
      %p138 = scmp.ne.s32.totalorder %s123, %s137
      %p139 = scmp.eq.s32.totalorder %s29, 0
      %p140 = por %p138, %p139
      %s142 = sadd.s32 %s141, 1
      %p145 = scmp.eq.s32.totalorder %s23, 1
      %p146 = scmp.ne.s32.totalorder %s141, %s143
      %p147 = scmp.eq.s32.totalorder %s23, 0
      %p148 = por %p146, %p147
      %p149 = scmp.ne.s32.totalorder %s141, %s143
      %p150 = scmp.eq.s32.totalorder %s28, 1
      %p151 = por %p149, %p150
      %p152 = scmp.ne.s32.totalorder %s143, %s144
      %p153 = scmp.eq.s32.totalorder %s28, 0
      %p154 = por %p152, %p153
      %p155 = scmp.ne.s32.totalorder %s143, %s144
      %p156 = scmp.eq.s32.totalorder %s29, 1
      %p157 = por %p155, %p156
      %p159 = scmp.ne.s32.totalorder %s144, %s158
      %p160 = scmp.eq.s32.totalorder %s29, 0
      %p161 = por %p159, %p160
      %s163 = sadd.s32 %s162, 1
      %p166 = scmp.eq.s32.totalorder %s23, 1
      %p167 = scmp.ne.s32.totalorder %s162, %s164
      %p168 = scmp.eq.s32.totalorder %s23, 0
      %p169 = por %p167, %p168
      %p170 = scmp.ne.s32.totalorder %s162, %s164
      %p171 = scmp.eq.s32.totalorder %s28, 1
      %p172 = por %p170, %p171
      %p173 = scmp.ne.s32.totalorder %s164, %s165
      %p174 = scmp.eq.s32.totalorder %s28, 0
      %p175 = por %p173, %p174
      %p176 = scmp.ne.s32.totalorder %s164, %s165
      %p177 = scmp.eq.s32.totalorder %s29, 1
      %p178 = por %p176, %p177
      %p180 = scmp.ne.s32.totalorder %s165, %s179
      %p181 = scmp.eq.s32.totalorder %s29, 0
      %p182 = por %p180, %p181
      %s184 = sadd.s32 %s183, 1
      %p187 = scmp.eq.s32.totalorder %s23, 1
      %p188 = scmp.ne.s32.totalorder %s183, %s185
      %p189 = scmp.eq.s32.totalorder %s23, 0
      %p190 = por %p188, %p189
      %p191 = scmp.ne.s32.totalorder %s183, %s185
      %p192 = scmp.eq.s32.totalorder %s28, 1
      %p193 = por %p191, %p192
      %p194 = scmp.ne.s32.totalorder %s185, %s186
      %p195 = scmp.eq.s32.totalorder %s28, 0
      %p196 = por %p194, %p195
      %p197 = scmp.ne.s32.totalorder %s185, %s186
      %p198 = scmp.eq.s32.totalorder %s29, 1
      %p199 = por %p197, %p198
      %p201 = scmp.ne.s32.totalorder %s186, %s200
      %p202 = scmp.eq.s32.totalorder %s29, 0
      %p203 = por %p201, %p202
      %s205 = sadd.s32 %s204, 1
      %p208 = scmp.eq.s32.totalorder %s23, 1
      %p209 = scmp.ne.s32.totalorder %s204, %s206
      %p210 = scmp.eq.s32.totalorder %s23, 0
      %p211 = por %p209, %p210
      %p212 = scmp.ne.s32.totalorder %s204, %s206
      %p213 = scmp.eq.s32.totalorder %s28, 1
      %p214 = por %p212, %p213
      %p215 = scmp.ne.s32.totalorder %s206, %s207
      %p216 = scmp.eq.s32.totalorder %s28, 0
      %p217 = por %p215, %p216
      %p218 = scmp.ne.s32.totalorder %s206, %s207
      %p219 = scmp.eq.s32.totalorder %s29, 1
      %p220 = por %p218, %p219
      %p222 = scmp.ne.s32.totalorder %s207, %s221
      %p223 = scmp.eq.s32.totalorder %s29, 0
      %p224 = por %p222, %p223
      %s225 = ssub.s32 %s23, %s30
      %p226 = scmp.eq.s32.totalorder %s225, 0
      %s228 = sadd.s32 %s227, 1
      %s229 = scalar_select %p226, %s227, %s228
      %p232 = pneg %p226
      %p233 = scmp.eq.s32.totalorder %s23, 1
      %p234 = por %p232, %p233
      %p235 = scmp.ne.s32.totalorder %s227, %s230
      %p236 = scmp.eq.s32.totalorder %s23, 0
      %p237 = por %p235, %p236
      %p238 = scmp.ne.s32.totalorder %s227, %s230
      %p239 = scmp.eq.s32.totalorder %s28, 1
      %p240 = por %p238, %p239
      %p241 = scmp.ne.s32.totalorder %s230, %s231
      %p242 = scmp.eq.s32.totalorder %s28, 0
      %p243 = por %p241, %p242
      %p244 = scmp.ne.s32.totalorder %s230, %s231
      %p245 = scmp.eq.s32.totalorder %s29, 1
      %p246 = por %p244, %p245
      %p248 = scmp.ne.s32.totalorder %s231, %s247
      %p249 = scmp.eq.s32.totalorder %s29, 0
      %p250 = por %p248, %p249
      %p251 = scmp.le.s32.totalorder 1, %s23
      %p252 = scmp.lt.s32.totalorder %s23, 3
      %p253 = pnand %p251, %p252
      %p254 = pneg %p253
      // Predicated region
      $region9: #{tpu_custom_call.1} parent=5 // pred_check
        _
      $region10: #{tpu_custom_call.1} parent=5 // pred_check_branch
        %256 = sbr.rel (%p253) target = $region12
      $region11: #{tpu_custom_call.1} parent=5 // pred_region
        %s257 = ssub.s32 %s23, 1
        // Predicated region
        $region13: #{tpu_custom_call.1} parent=11 // pred_check
          %p258 = pneg %p70
        $region14: #{tpu_custom_call.1} parent=11 // pred_check_branch
          %260 = sbr.rel (%p258) target = $region16
        $region15: #{tpu_custom_call.1} parent=11 // pred_region
          %s262 = ssub.s32 2048, 2048
          %263 = vsyncadd [#allocation7], %s262
          %s264 = sshll.u32 [#allocation6], 4
          %s265 = int_to_ptr.vmem [resolvable:$true] %s264
          %270 = dma.hbm_to_vmem [thread:$0]  %s1, 2048, %s265, [#allocation7], 128, 128, 8
        $region16: #{tpu_custom_call.1} parent=11 // pred_fallthru
          _
        // Predicated region
        $region17: #{tpu_custom_call.1} parent=11 // pred_check
          %p271 = pneg %p91
        $region18: #{tpu_custom_call.1} parent=11 // pred_check_branch
          %273 = sbr.rel (%p271) target = $region20
        $region19: #{tpu_custom_call.1} parent=11 // pred_region
          _
        $region20: #{tpu_custom_call.1} parent=11 // pred_fallthru
          _
        // Predicated region
        $region21: #{tpu_custom_call.1} parent=11 // pred_check
          %p274 = pneg %p112
        $region22: #{tpu_custom_call.1} parent=11 // pred_check_branch
          %276 = sbr.rel (%p274) target = $region24
        $region23: #{tpu_custom_call.1} parent=11 // pred_region
          %s278 = ssub.s32 6144, 6144
          %279 = vsyncadd [#allocation7], %s278
          %s280 = sshll.u32 [#allocation8], 4
          %s281 = int_to_ptr.vmem [resolvable:$true] %s280
          %286 = dma.hbm_to_vmem [thread:$0]  %s3, 6144, %s281, [#allocation7], 128, 128, 8
        $region24: #{tpu_custom_call.1} parent=11 // pred_fallthru
          _
        // Predicated region
        $region25: #{tpu_custom_call.1} parent=11 // pred_check
          %p287 = pneg %p133
        $region26: #{tpu_custom_call.1} parent=11 // pred_check_branch
          %289 = sbr.rel (%p287) target = $region28
        $region27: #{tpu_custom_call.1} parent=11 // pred_region
          _
        $region28: #{tpu_custom_call.1} parent=11 // pred_fallthru
          _
        // Predicated region
        $region29: #{tpu_custom_call.1} parent=11 // pred_check
          %p290 = pneg %p154
        $region30: #{tpu_custom_call.1} parent=11 // pred_check_branch
          %292 = sbr.rel (%p290) target = $region32
        $region31: #{tpu_custom_call.1} parent=11 // pred_region
          %s294 = ssub.s32 6144, 6144
          %295 = vsyncadd [#allocation10], %s294
          %s296 = sshll.u32 [#allocation9], 4
          %s297 = int_to_ptr.vmem [resolvable:$true] %s296
          %302 = dma.hbm_to_vmem [thread:$0]  %s5, 6144, %s297, [#allocation10], 128, 128, 8
        $region32: #{tpu_custom_call.1} parent=11 // pred_fallthru
          _
        // Predicated region
        $region33: #{tpu_custom_call.1} parent=11 // pred_check
          %p303 = pneg %p175
        $region34: #{tpu_custom_call.1} parent=11 // pred_check_branch
          %305 = sbr.rel (%p303) target = $region36
        $region35: #{tpu_custom_call.1} parent=11 // pred_region
          _
        $region36: #{tpu_custom_call.1} parent=11 // pred_fallthru
          _
        // Predicated region
        $region37: #{tpu_custom_call.1} parent=11 // pred_check
          %p306 = pneg %p196
        $region38: #{tpu_custom_call.1} parent=11 // pred_check_branch
          %308 = sbr.rel (%p306) target = $region40
        $region39: #{tpu_custom_call.1} parent=11 // pred_region
          _
        $region40: #{tpu_custom_call.1} parent=11 // pred_fallthru
          _
        // Predicated region
        $region41: #{tpu_custom_call.1} parent=11 // pred_check
          %p309 = pneg %p217
        $region42: #{tpu_custom_call.1} parent=11 // pred_check_branch
          %311 = sbr.rel (%p309) target = $region44
        $region43: #{tpu_custom_call.1} parent=11 // pred_region
          _
        $region44: #{tpu_custom_call.1} parent=11 // pred_fallthru
          _
      $region12: #{tpu_custom_call.1} parent=5 // pred_fallthru
        _
      %p312 = scmp.lt.s32.totalorder %s23, 2
      // Predicated region
      $region45: #{tpu_custom_call.1} parent=5 // pred_check
        %p313 = pneg %p312
      $region46: #{tpu_custom_call.1} parent=5 // pred_check_branch
        %315 = sbr.rel (%p313) target = $region48
      $region47: #{tpu_custom_call.1} parent=5 // pred_region
        // Predicated region
        $region49: #{tpu_custom_call.1} parent=47 // pred_check
          %p316 = pneg %p43
        $region50: #{tpu_custom_call.1} parent=47 // pred_check_branch
          %318 = sbr.rel (%p316) target = $region52
        $region51: #{tpu_custom_call.1} parent=47 // pred_region
          %s319 = sand.u32 %s33, 1
          %s320 = scalar_lea.sflag [#allocation4], %s319
          %s321 = sand.u32 %s33, 1
          %s322 = smul.addr %s321, 16
          %s323 = scalar_lea.vmem [#allocation3], %s322
          %s325 = ssub.s32 256, 256
          %326 = vsyncadd %s320, %s325
          %s327 = smul.addr %s23, 2
          %s328 = smul.addr %s327, 128
          %s329 = scalar_lea.hbm %s0, %s328
          %s330 = sshll.u32 %s323, 4
          %s331 = int_to_ptr.vmem [resolvable:$true] %s330
          %336 = dma.hbm_to_vmem [thread:$0]  %s329, 256, %s331, %s320, 128, 128, 8
        $region52: #{tpu_custom_call.1} parent=47 // pred_fallthru
          _
      $region48: #{tpu_custom_call.1} parent=5 // pred_fallthru
        _
      %p337 = scmp.le.s32.totalorder 1, %s23
      %p338 = scmp.lt.s32.totalorder %s23, 3
      %p339 = pnand %p337, %p338
      %p340 = pneg %p339
      // Predicated region
      $region53: #{tpu_custom_call.1} parent=5 // pred_check
        _
      $region54: #{tpu_custom_call.1} parent=5 // pred_check_branch
        %342 = sbr.rel (%p339) target = $region56
      $region55: #{tpu_custom_call.1} parent=5 // pred_region
        %s343 = ssub.s32 %s23, 1
        %s344 = sand.u32 %s36, 1
        %s345 = scalar_lea.sflag [#allocation4], %s344
        %s346 = sand.u32 %s36, 1
        %s347 = smul.addr %s346, 16
        %s348 = scalar_lea.vmem [#allocation3], %s347
        // Predicated region
        $region57: #{tpu_custom_call.1} parent=55 // pred_check
          %p349 = pneg %p49
        $region58: #{tpu_custom_call.1} parent=55 // pred_check_branch
          %351 = sbr.rel (%p349) target = $region60
        $region59: #{tpu_custom_call.1} parent=55 // pred_region
          %352 = dma.done %s345, 256
        $region60: #{tpu_custom_call.1} parent=55 // pred_fallthru
          _
        // Predicated region
        $region61: #{tpu_custom_call.1} parent=55 // pred_check
          %p353 = pneg %p70
        $region62: #{tpu_custom_call.1} parent=55 // pred_check_branch
          %355 = sbr.rel (%p353) target = $region64
        $region63: #{tpu_custom_call.1} parent=55 // pred_region
          %356 = dma.done [#allocation7], 2048
        $region64: #{tpu_custom_call.1} parent=55 // pred_fallthru
          _
        // Predicated region
        $region65: #{tpu_custom_call.1} parent=55 // pred_check
          %p357 = pneg %p112
        $region66: #{tpu_custom_call.1} parent=55 // pred_check_branch
          %359 = sbr.rel (%p357) target = $region68
        $region67: #{tpu_custom_call.1} parent=55 // pred_region
          %360 = dma.done [#allocation7], 6144
        $region68: #{tpu_custom_call.1} parent=55 // pred_fallthru
          _
        // Predicated region
        $region69: #{tpu_custom_call.1} parent=55 // pred_check
          %p361 = pneg %p154
        $region70: #{tpu_custom_call.1} parent=55 // pred_check_branch
          %363 = sbr.rel (%p361) target = $region72
        $region71: #{tpu_custom_call.1} parent=55 // pred_region
          %364 = dma.done [#allocation10], 6144
        $region72: #{tpu_custom_call.1} parent=55 // pred_fallthru
          _
        %s365 = sand.u32 %s36, 1
        %s366 = scalar_lea.sflag [#allocation4], %s365
        %s367 = sand.u32 %s36, 1
        %s368 = smul.addr %s367, 16
        %s369 = scalar_lea.vmem [#allocation3], %s368
        %p370 = pneg %p49
        %p371 = pneg %p46
        %p372 = pneg %p70
        %p373 = pneg %p67
        %p374 = pneg %p91
        %p375 = pneg %p88
        %p376 = pneg %p112
        %p377 = pneg %p109
        %p378 = pneg %p133
        %p379 = pneg %p130
        %p380 = pneg %p154
        %p381 = pneg %p151
        %p382 = pneg %p175
        %p383 = pneg %p172
        %p384 = pneg %p196
        %p385 = pneg %p193
        %p386 = pneg %p217
        %p387 = pneg %p214
        %p388 = pneg %p243
        %p389 = pneg %p240
        %s390 = sand.u32 %s230, 1
        %s391 = scalar_lea.sflag [#allocation5], %s390
        %s392 = sand.u32 %s230, 1
        %s393 = smul.addr %s392, 16
        %s394 = scalar_lea.vmem [#allocation11], %s393
        %395 = vst [vmem:[#allocation2] sm:$0x1] 0.0
        %396 = vst [vmem:[#allocation2 + $0x11] sm:$0x1] 0.0
        %v397 = vld [vmem:[%s348] sm:$0xff]
        %v398 = vld [vmem:[%s348 + $0x8] sm:$0xff]
        %v399 = vld [vmem:[#allocation6] sm:$0xff]
        %v400 = vld [vmem:[#allocation6 + $0x8] sm:$0xff]
        %v401 = vld [vmem:[#allocation6 + $0x10] sm:$0xff]
        %v402 = vld [vmem:[#allocation6 + $0x18] sm:$0xff]
        %v403 = vld [vmem:[#allocation6 + $0x20] sm:$0xff]
        %v404 = vld [vmem:[#allocation6 + $0x28] sm:$0xff]
        %v405 = vld [vmem:[#allocation6 + $0x30] sm:$0xff]
        %v406 = vld [vmem:[#allocation6 + $0x38] sm:$0xff]
        %v407 = vld [vmem:[#allocation6 + $0x40] sm:$0xff]
        %v408 = vld [vmem:[#allocation6 + $0x48] sm:$0xff]
        %v409 = vld [vmem:[#allocation6 + $0x50] sm:$0xff]
        %v410 = vld [vmem:[#allocation6 + $0x58] sm:$0xff]
        %v411 = vld [vmem:[#allocation6 + $0x60] sm:$0xff]
        %v412 = vld [vmem:[#allocation6 + $0x68] sm:$0xff]
        %v413 = vld [vmem:[#allocation6 + $0x70] sm:$0xff]
        %v414 = vld [vmem:[#allocation6 + $0x78] sm:$0xff]
        %v415 = vld [vmem:[%s2] sm:$0x1]
        %v417 = vlaneseq
        %v418 = vshrl.u32 %v417, 7
        %v419 = vsub.s32 0, %v418
        %v420 = vrot.slane %v415, %v419
        %422 = vmatprep.subr.mxu0 0.0
        %423 = vmatpush1.msra.mxu0 %v399
        %424 = vmatprep.subr.mxu0 0.0
        %425 = vmatpush1.msra.mxu0 %v400
        %426 = vmatprep.subr.mxu0 0.0
        %427 = vmatpush1.msra.mxu0 %v401
        %428 = vmatprep.subr.mxu0 0.0
        %429 = vmatpush1.msra.mxu0 %v402
        %430 = vmatprep.subr.mxu0 0.0
        %431 = vmatpush1.msra.mxu0 %v403
        %432 = vmatprep.subr.mxu0 0.0
        %433 = vmatpush1.msra.mxu0 %v404
        %434 = vmatprep.subr.mxu0 0.0
        %435 = vmatpush1.msra.mxu0 %v405
        %436 = vmatprep.subr.mxu0 0.0
        %437 = vmatpush1.msra.mxu0 %v406
        %438 = vmatprep.subr.mxu0 0.0
        %439 = vmatpush1.msra.mxu0 %v407
        %440 = vmatprep.subr.mxu0 0.0
        %441 = vmatpush1.msra.mxu0 %v408
        %442 = vmatprep.subr.mxu0 0.0
        %443 = vmatpush1.msra.mxu0 %v409
        %444 = vmatprep.subr.mxu0 0.0
        %445 = vmatpush1.msra.mxu0 %v410
        %446 = vmatprep.subr.mxu0 0.0
        %447 = vmatpush1.msra.mxu0 %v411
        %448 = vmatprep.subr.mxu0 0.0
        %449 = vmatpush1.msra.mxu0 %v412
        %450 = vmatprep.subr.mxu0 0.0
        %451 = vmatpush1.msra.mxu0 %v413
        %452 = vmatprep.subr.mxu0 0.0
        %453 = vmatpush1.msra.mxu0 %v414
        %454 = vmatprep.subr.mxu0 0.0
        %455 = vmatpush1.msra.mxu0 0.0
        %456 = vmatprep.subr.mxu0 0.0
        %457 = vmatpush1.msra.mxu0 0.0
        %458 = vmatprep.subr.mxu0 0.0
        %459 = vmatpush1.msra.mxu0 0.0
        %460 = vmatprep.subr.mxu0 0.0
        %461 = vmatpush1.msra.mxu0 0.0
        %462 = vmatprep.subr.mxu0 0.0
        %463 = vmatpush1.msra.mxu0 0.0
        %464 = vmatprep.subr.mxu0 0.0
        %465 = vmatpush1.msra.mxu0 0.0
        %466 = vmatprep.subr.mxu0 0.0
        %467 = vmatpush1.msra.mxu0 0.0
        %468 = vmatprep.subr.mxu0 0.0
        %469 = vmatpush1.msra.mxu0 0.0
        %470 = vmatprep.subr.mxu0 0.0
        %471 = vmatpush1.msra.mxu0 0.0
        %472 = vmatprep.subr.mxu0 0.0
        %473 = vmatpush1.msra.mxu0 0.0
        %474 = vmatprep.subr.mxu0 0.0
        %475 = vmatpush1.msra.mxu0 0.0
        %476 = vmatprep.subr.mxu0 0.0
        %477 = vmatpush1.msra.mxu0 0.0
        %478 = vmatprep.subr.mxu0 0.0
        %479 = vmatpush1.msra.mxu0 0.0
        %480 = vmatprep.subr.mxu0 0.0
        %481 = vmatpush1.msra.mxu0 0.0
        %482 = vmatprep.subr.mxu0 0.0
        %483 = vmatpush1.msra.mxu0 0.0
        %484 = vmatprep.subr.mxu0 0.0
        %485 = vmatpush1.msra.mxu0 0.0
        %486 = vmatprep.mubr.f32.mxu0 0.0
        %487 = vmatmul.mubr.f32.gmra.mrb[0].mxu0 %v397
        %v488 = vpop.f32.mrb[0].mxu0
        %v489 = vadd.f32 %v420, %v488
        %v490 = vpop.f32.mrb[0].mxu0
        %491 = vmatprep.mubr.f32.mxu0 0.0
        %492 = vmatmul.mubr.f32.gmra.mrb[0].mxu0 %v398
        %v493 = vpop.f32.mrb[0].mxu0
        %v494 = vadd.f32 %v420, %v493
        %v495 = vpop.f32.mrb[0].mxu0
        %496 = vdwg.mxu0
        %v497 = vmax.f32 %v489, 0.0
        %v498 = vmax.f32 %v494, 0.0
        %499 = vst [vmem:[#allocation2 + $0x1] sm:$0xff] %v497
        %500 = vst [vmem:[#allocation2 + $0x9] sm:$0xff] %v498
        %v501 = vld [vmem:[#allocation2] sm:$0xff]
        %v502 = vld [vmem:[#allocation2 + $0x8] sm:$0xff]
        %v503 = vld [vmem:[#allocation2 + $0x1] sm:$0xff]
        %v504 = vld [vmem:[#allocation2 + $0x9] sm:$0xff]
        %v505 = vld [vmem:[#allocation2 + $0x2] sm:$0xff]
        %v506 = vld [vmem:[#allocation2 + $0xa] sm:$0xff]
        %v507 = vld [vmem:[#allocation8] sm:$0xff]
        %v508 = vld [vmem:[#allocation8 + $0x8] sm:$0xff]
        %v509 = vld [vmem:[#allocation8 + $0x10] sm:$0xff]
        %v510 = vld [vmem:[#allocation8 + $0x18] sm:$0xff]
        %v511 = vld [vmem:[#allocation8 + $0x20] sm:$0xff]
        %v512 = vld [vmem:[#allocation8 + $0x28] sm:$0xff]
        %v513 = vld [vmem:[#allocation8 + $0x30] sm:$0xff]
        %v514 = vld [vmem:[#allocation8 + $0x38] sm:$0xff]
        %v515 = vld [vmem:[#allocation8 + $0x40] sm:$0xff]
        %v516 = vld [vmem:[#allocation8 + $0x48] sm:$0xff]
        %v517 = vld [vmem:[#allocation8 + $0x50] sm:$0xff]
        %v518 = vld [vmem:[#allocation8 + $0x58] sm:$0xff]
        %v519 = vld [vmem:[#allocation8 + $0x60] sm:$0xff]
        %v520 = vld [vmem:[#allocation8 + $0x68] sm:$0xff]
        %v521 = vld [vmem:[#allocation8 + $0x70] sm:$0xff]
        %v522 = vld [vmem:[#allocation8 + $0x78] sm:$0xff]
        %v523 = vld [vmem:[#allocation8 + $0x80] sm:$0xff]
        %v524 = vld [vmem:[#allocation8 + $0x88] sm:$0xff]
        %v525 = vld [vmem:[#allocation8 + $0x90] sm:$0xff]
        %v526 = vld [vmem:[#allocation8 + $0x98] sm:$0xff]
        %v527 = vld [vmem:[#allocation8 + $0xa0] sm:$0xff]
        %v528 = vld [vmem:[#allocation8 + $0xa8] sm:$0xff]
        %v529 = vld [vmem:[#allocation8 + $0xb0] sm:$0xff]
        %v530 = vld [vmem:[#allocation8 + $0xb8] sm:$0xff]
        %v531 = vld [vmem:[#allocation8 + $0xc0] sm:$0xff]
        %v532 = vld [vmem:[#allocation8 + $0xc8] sm:$0xff]
        %v533 = vld [vmem:[#allocation8 + $0xd0] sm:$0xff]
        %v534 = vld [vmem:[#allocation8 + $0xd8] sm:$0xff]
        %v535 = vld [vmem:[#allocation8 + $0xe0] sm:$0xff]
        %v536 = vld [vmem:[#allocation8 + $0xe8] sm:$0xff]
        %v537 = vld [vmem:[#allocation8 + $0xf0] sm:$0xff]
        %v538 = vld [vmem:[#allocation8 + $0xf8] sm:$0xff]
        %v539 = vld [vmem:[#allocation8 + $0x100] sm:$0xff]
        %v540 = vld [vmem:[#allocation8 + $0x108] sm:$0xff]
        %v541 = vld [vmem:[#allocation8 + $0x110] sm:$0xff]
        %v542 = vld [vmem:[#allocation8 + $0x118] sm:$0xff]
        %v543 = vld [vmem:[#allocation8 + $0x120] sm:$0xff]
        %v544 = vld [vmem:[#allocation8 + $0x128] sm:$0xff]
        %v545 = vld [vmem:[#allocation8 + $0x130] sm:$0xff]
        %v546 = vld [vmem:[#allocation8 + $0x138] sm:$0xff]
        %v547 = vld [vmem:[#allocation8 + $0x140] sm:$0xff]
        %v548 = vld [vmem:[#allocation8 + $0x148] sm:$0xff]
        %v549 = vld [vmem:[#allocation8 + $0x150] sm:$0xff]
        %v550 = vld [vmem:[#allocation8 + $0x158] sm:$0xff]
        %v551 = vld [vmem:[#allocation8 + $0x160] sm:$0xff]
        %v552 = vld [vmem:[#allocation8 + $0x168] sm:$0xff]
        %v553 = vld [vmem:[#allocation8 + $0x170] sm:$0xff]
        %v554 = vld [vmem:[#allocation8 + $0x178] sm:$0xff]
        %v555 = vld [vmem:[%s4] sm:$0x1]
        %v557 = vlaneseq
        %v558 = vshrl.u32 %v557, 7
        %v559 = vsub.s32 0, %v558
        %v560 = vrot.slane %v555, %v559
        %562 = vmatprep.subr.mxu0 0.0
        %563 = vmatpush1.msra.mxu0 %v507
        %564 = vmatprep.subr.mxu0 0.0
        %565 = vmatpush1.msra.mxu0 %v508
        %566 = vmatprep.subr.mxu0 0.0
        %567 = vmatpush1.msra.mxu0 %v509
        %568 = vmatprep.subr.mxu0 0.0
        %569 = vmatpush1.msra.mxu0 %v510
        %570 = vmatprep.subr.mxu0 0.0
        %571 = vmatpush1.msra.mxu0 %v511
        %572 = vmatprep.subr.mxu0 0.0
        %573 = vmatpush1.msra.mxu0 %v512
        %574 = vmatprep.subr.mxu0 0.0
        %575 = vmatpush1.msra.mxu0 %v513
        %576 = vmatprep.subr.mxu0 0.0
        %577 = vmatpush1.msra.mxu0 %v514
        %578 = vmatprep.subr.mxu0 0.0
        %579 = vmatpush1.msra.mxu0 %v515
        %580 = vmatprep.subr.mxu0 0.0
        %581 = vmatpush1.msra.mxu0 %v516
        %582 = vmatprep.subr.mxu0 0.0
        %583 = vmatpush1.msra.mxu0 %v517
        %584 = vmatprep.subr.mxu0 0.0
        %585 = vmatpush1.msra.mxu0 %v518
        %586 = vmatprep.subr.mxu0 0.0
        %587 = vmatpush1.msra.mxu0 %v519
        %588 = vmatprep.subr.mxu0 0.0
        %589 = vmatpush1.msra.mxu0 %v520
        %590 = vmatprep.subr.mxu0 0.0
        %591 = vmatpush1.msra.mxu0 %v521
        %592 = vmatprep.subr.mxu0 0.0
        %593 = vmatpush1.msra.mxu0 %v522
        %594 = vmatprep.subr.mxu0 0.0
        %595 = vmatpush1.msra.mxu0 %v523
        %596 = vmatprep.subr.mxu0 0.0
        %597 = vmatpush1.msra.mxu0 %v524
        %598 = vmatprep.subr.mxu0 0.0
        %599 = vmatpush1.msra.mxu0 %v525
        %600 = vmatprep.subr.mxu0 0.0
        %601 = vmatpush1.msra.mxu0 %v526
        %602 = vmatprep.subr.mxu0 0.0
        %603 = vmatpush1.msra.mxu0 %v527
        %604 = vmatprep.subr.mxu0 0.0
        %605 = vmatpush1.msra.mxu0 %v528
        %606 = vmatprep.subr.mxu0 0.0
        %607 = vmatpush1.msra.mxu0 %v529
        %608 = vmatprep.subr.mxu0 0.0
        %609 = vmatpush1.msra.mxu0 %v530
        %610 = vmatprep.subr.mxu0 0.0
        %611 = vmatpush1.msra.mxu0 %v531
        %612 = vmatprep.subr.mxu0 0.0
        %613 = vmatpush1.msra.mxu0 %v532
        %614 = vmatprep.subr.mxu0 0.0
        %615 = vmatpush1.msra.mxu0 %v533
        %616 = vmatprep.subr.mxu0 0.0
        %617 = vmatpush1.msra.mxu0 %v534
        %618 = vmatprep.subr.mxu0 0.0
        %619 = vmatpush1.msra.mxu0 %v535
        %620 = vmatprep.subr.mxu0 0.0
        %621 = vmatpush1.msra.mxu0 %v536
        %622 = vmatprep.subr.mxu0 0.0
        %623 = vmatpush1.msra.mxu0 %v537
        %624 = vmatprep.subr.mxu0 0.0
        %625 = vmatpush1.msra.mxu0 %v538
        %626 = vmatprep.mubr.f32.mxu0 %v503
        %627 = vmatmul.mubr.f32.gmra.mrb[0].mxu0 %v501
        %v628 = vpop.f32.mrb[0].mxu0
        %v629 = vadd.f32 %v560, %v628
        %v630 = vpop.f32.mrb[0].mxu0
        %631 = vmatprep.mubr.f32.mxu0 %v504
        %632 = vmatmul.mubr.f32.gmra.mrb[0].mxu0 %v502
        %v633 = vpop.f32.mrb[0].mxu0
        %v634 = vadd.f32 %v560, %v633
        %v635 = vpop.f32.mrb[0].mxu0
        %636 = vdwg.mxu0
        %637 = vmatprep.subr.mxu0 0.0
        %638 = vmatpush1.msra.mxu0 %v539
        %639 = vmatprep.subr.mxu0 0.0
        %640 = vmatpush1.msra.mxu0 %v540
        %641 = vmatprep.subr.mxu0 0.0
        %642 = vmatpush1.msra.mxu0 %v541
        %643 = vmatprep.subr.mxu0 0.0
        %644 = vmatpush1.msra.mxu0 %v542
        %645 = vmatprep.subr.mxu0 0.0
        %646 = vmatpush1.msra.mxu0 %v543
        %647 = vmatprep.subr.mxu0 0.0
        %648 = vmatpush1.msra.mxu0 %v544
        %649 = vmatprep.subr.mxu0 0.0
        %650 = vmatpush1.msra.mxu0 %v545
        %651 = vmatprep.subr.mxu0 0.0
        %652 = vmatpush1.msra.mxu0 %v546
        %653 = vmatprep.subr.mxu0 0.0
        %654 = vmatpush1.msra.mxu0 %v547
        %655 = vmatprep.subr.mxu0 0.0
        %656 = vmatpush1.msra.mxu0 %v548
        %657 = vmatprep.subr.mxu0 0.0
        %658 = vmatpush1.msra.mxu0 %v549
        %659 = vmatprep.subr.mxu0 0.0
        %660 = vmatpush1.msra.mxu0 %v550
        %661 = vmatprep.subr.mxu0 0.0
        %662 = vmatpush1.msra.mxu0 %v551
        %663 = vmatprep.subr.mxu0 0.0
        %664 = vmatpush1.msra.mxu0 %v552
        %665 = vmatprep.subr.mxu0 0.0
        %666 = vmatpush1.msra.mxu0 %v553
        %667 = vmatprep.subr.mxu0 0.0
        %668 = vmatpush1.msra.mxu0 %v554
        %669 = vmatprep.subr.mxu0 0.0
        %670 = vmatpush1.msra.mxu0 0.0
        %671 = vmatprep.subr.mxu0 0.0
        %672 = vmatpush1.msra.mxu0 0.0
        %673 = vmatprep.subr.mxu0 0.0
        %674 = vmatpush1.msra.mxu0 0.0
        %675 = vmatprep.subr.mxu0 0.0
        %676 = vmatpush1.msra.mxu0 0.0
        %677 = vmatprep.subr.mxu0 0.0
        %678 = vmatpush1.msra.mxu0 0.0
        %679 = vmatprep.subr.mxu0 0.0
        %680 = vmatpush1.msra.mxu0 0.0
        %681 = vmatprep.subr.mxu0 0.0
        %682 = vmatpush1.msra.mxu0 0.0
        %683 = vmatprep.subr.mxu0 0.0
        %684 = vmatpush1.msra.mxu0 0.0
        %685 = vmatprep.subr.mxu0 0.0
        %686 = vmatpush1.msra.mxu0 0.0
        %687 = vmatprep.subr.mxu0 0.0
        %688 = vmatpush1.msra.mxu0 0.0
        %689 = vmatprep.subr.mxu0 0.0
        %690 = vmatpush1.msra.mxu0 0.0
        %691 = vmatprep.subr.mxu0 0.0
        %692 = vmatpush1.msra.mxu0 0.0
        %693 = vmatprep.subr.mxu0 0.0
        %694 = vmatpush1.msra.mxu0 0.0
        %695 = vmatprep.subr.mxu0 0.0
        %696 = vmatpush1.msra.mxu0 0.0
        %697 = vmatprep.subr.mxu0 0.0
        %698 = vmatpush1.msra.mxu0 0.0
        %699 = vmatprep.subr.mxu0 0.0
        %700 = vmatpush1.msra.mxu0 0.0
        %701 = vmatprep.mubr.f32.mxu0 0.0
        %702 = vmatmul.mubr.f32.gmra.mrb[0].mxu0 %v505
        %v703 = vpop.f32.mrb[0].mxu0
        %v704 = vadd.f32 %v629, %v703
        %v705 = vpop.f32.mrb[0].mxu0
        %706 = vmatprep.mubr.f32.mxu0 0.0
        %707 = vmatmul.mubr.f32.gmra.mrb[0].mxu0 %v506
        %v708 = vpop.f32.mrb[0].mxu0
        %v709 = vadd.f32 %v634, %v708
        %v710 = vpop.f32.mrb[0].mxu0
        %711 = vdwg.mxu0
        %v712 = vmax.f32 %v704, 0.0
        %v713 = vmax.f32 %v709, 0.0
        %714 = vst [vmem:[#allocation2 + $0x1] sm:$0xff] %v712
        %715 = vst [vmem:[#allocation2 + $0x9] sm:$0xff] %v713
        %v716 = vld [vmem:[#allocation2] sm:$0xff]
        %v717 = vld [vmem:[#allocation2 + $0x8] sm:$0xff]
        %v718 = vld [vmem:[#allocation2 + $0x1] sm:$0xff]
        %v719 = vld [vmem:[#allocation2 + $0x9] sm:$0xff]
        %v720 = vld [vmem:[#allocation2 + $0x2] sm:$0xff]
        %v721 = vld [vmem:[#allocation2 + $0xa] sm:$0xff]
        %v722 = vld [vmem:[#allocation9] sm:$0xff]
        %v723 = vld [vmem:[#allocation9 + $0x8] sm:$0xff]
        %v724 = vld [vmem:[#allocation9 + $0x10] sm:$0xff]
        %v725 = vld [vmem:[#allocation9 + $0x18] sm:$0xff]
        %v726 = vld [vmem:[#allocation9 + $0x20] sm:$0xff]
        %v727 = vld [vmem:[#allocation9 + $0x28] sm:$0xff]
        %v728 = vld [vmem:[#allocation9 + $0x30] sm:$0xff]
        %v729 = vld [vmem:[#allocation9 + $0x38] sm:$0xff]
        %v730 = vld [vmem:[#allocation9 + $0x40] sm:$0xff]
        %v731 = vld [vmem:[#allocation9 + $0x48] sm:$0xff]
        %v732 = vld [vmem:[#allocation9 + $0x50] sm:$0xff]
        %v733 = vld [vmem:[#allocation9 + $0x58] sm:$0xff]
        %v734 = vld [vmem:[#allocation9 + $0x60] sm:$0xff]
        %v735 = vld [vmem:[#allocation9 + $0x68] sm:$0xff]
        %v736 = vld [vmem:[#allocation9 + $0x70] sm:$0xff]
        %v737 = vld [vmem:[#allocation9 + $0x78] sm:$0xff]
        %v738 = vld [vmem:[#allocation9 + $0x80] sm:$0xff]
        %v739 = vld [vmem:[#allocation9 + $0x88] sm:$0xff]
        %v740 = vld [vmem:[#allocation9 + $0x90] sm:$0xff]
        %v741 = vld [vmem:[#allocation9 + $0x98] sm:$0xff]
        %v742 = vld [vmem:[#allocation9 + $0xa0] sm:$0xff]
        %v743 = vld [vmem:[#allocation9 + $0xa8] sm:$0xff]
        %v744 = vld [vmem:[#allocation9 + $0xb0] sm:$0xff]
        %v745 = vld [vmem:[#allocation9 + $0xb8] sm:$0xff]
        %v746 = vld [vmem:[#allocation9 + $0xc0] sm:$0xff]
        %v747 = vld [vmem:[#allocation9 + $0xc8] sm:$0xff]
        %v748 = vld [vmem:[#allocation9 + $0xd0] sm:$0xff]
        %v749 = vld [vmem:[#allocation9 + $0xd8] sm:$0xff]
        %v750 = vld [vmem:[#allocation9 + $0xe0] sm:$0xff]
        %v751 = vld [vmem:[#allocation9 + $0xe8] sm:$0xff]
        %v752 = vld [vmem:[#allocation9 + $0xf0] sm:$0xff]
        %v753 = vld [vmem:[#allocation9 + $0xf8] sm:$0xff]
        %v754 = vld [vmem:[#allocation9 + $0x100] sm:$0xff]
        %v755 = vld [vmem:[#allocation9 + $0x108] sm:$0xff]
        %v756 = vld [vmem:[#allocation9 + $0x110] sm:$0xff]
        %v757 = vld [vmem:[#allocation9 + $0x118] sm:$0xff]
        %v758 = vld [vmem:[#allocation9 + $0x120] sm:$0xff]
        %v759 = vld [vmem:[#allocation9 + $0x128] sm:$0xff]
        %v760 = vld [vmem:[#allocation9 + $0x130] sm:$0xff]
        %v761 = vld [vmem:[#allocation9 + $0x138] sm:$0xff]
        %v762 = vld [vmem:[#allocation9 + $0x140] sm:$0xff]
        %v763 = vld [vmem:[#allocation9 + $0x148] sm:$0xff]
        %v764 = vld [vmem:[#allocation9 + $0x150] sm:$0xff]
        %v765 = vld [vmem:[#allocation9 + $0x158] sm:$0xff]
        %v766 = vld [vmem:[#allocation9 + $0x160] sm:$0xff]
        %v767 = vld [vmem:[#allocation9 + $0x168] sm:$0xff]
        %v768 = vld [vmem:[#allocation9 + $0x170] sm:$0xff]
        %v769 = vld [vmem:[#allocation9 + $0x178] sm:$0xff]
        %v770 = vld [vmem:[%s6] sm:$0x1]
        %v772 = vlaneseq
        %v773 = vshrl.u32 %v772, 7
        %v774 = vsub.s32 0, %v773
        %v775 = vrot.slane %v770, %v774
        %777 = vmatprep.subr.mxu0 0.0
        %778 = vmatpush1.msra.mxu0 %v722
        %779 = vmatprep.subr.mxu0 0.0
        %780 = vmatpush1.msra.mxu0 %v723
        %781 = vmatprep.subr.mxu0 0.0
        %782 = vmatpush1.msra.mxu0 %v724
        %783 = vmatprep.subr.mxu0 0.0
        %784 = vmatpush1.msra.mxu0 %v725
        %785 = vmatprep.subr.mxu0 0.0
        %786 = vmatpush1.msra.mxu0 %v726
        %787 = vmatprep.subr.mxu0 0.0
        %788 = vmatpush1.msra.mxu0 %v727
        %789 = vmatprep.subr.mxu0 0.0
        %790 = vmatpush1.msra.mxu0 %v728
        %791 = vmatprep.subr.mxu0 0.0
        %792 = vmatpush1.msra.mxu0 %v729
        %793 = vmatprep.subr.mxu0 0.0
        %794 = vmatpush1.msra.mxu0 %v730
        %795 = vmatprep.subr.mxu0 0.0
        %796 = vmatpush1.msra.mxu0 %v731
        %797 = vmatprep.subr.mxu0 0.0
        %798 = vmatpush1.msra.mxu0 %v732
        %799 = vmatprep.subr.mxu0 0.0
        %800 = vmatpush1.msra.mxu0 %v733
        %801 = vmatprep.subr.mxu0 0.0
        %802 = vmatpush1.msra.mxu0 %v734
        %803 = vmatprep.subr.mxu0 0.0
        %804 = vmatpush1.msra.mxu0 %v735
        %805 = vmatprep.subr.mxu0 0.0
        %806 = vmatpush1.msra.mxu0 %v736
        %807 = vmatprep.subr.mxu0 0.0
        %808 = vmatpush1.msra.mxu0 %v737
        %809 = vmatprep.subr.mxu0 0.0
        %810 = vmatpush1.msra.mxu0 %v738
        %811 = vmatprep.subr.mxu0 0.0
        %812 = vmatpush1.msra.mxu0 %v739
        %813 = vmatprep.subr.mxu0 0.0
        %814 = vmatpush1.msra.mxu0 %v740
        %815 = vmatprep.subr.mxu0 0.0
        %816 = vmatpush1.msra.mxu0 %v741
        %817 = vmatprep.subr.mxu0 0.0
        %818 = vmatpush1.msra.mxu0 %v742
        %819 = vmatprep.subr.mxu0 0.0
        %820 = vmatpush1.msra.mxu0 %v743
        %821 = vmatprep.subr.mxu0 0.0
        %822 = vmatpush1.msra.mxu0 %v744
        %823 = vmatprep.subr.mxu0 0.0
        %824 = vmatpush1.msra.mxu0 %v745
        %825 = vmatprep.subr.mxu0 0.0
        %826 = vmatpush1.msra.mxu0 %v746
        %827 = vmatprep.subr.mxu0 0.0
        %828 = vmatpush1.msra.mxu0 %v747
        %829 = vmatprep.subr.mxu0 0.0
        %830 = vmatpush1.msra.mxu0 %v748
        %831 = vmatprep.subr.mxu0 0.0
        %832 = vmatpush1.msra.mxu0 %v749
        %833 = vmatprep.subr.mxu0 0.0
        %834 = vmatpush1.msra.mxu0 %v750
        %835 = vmatprep.subr.mxu0 0.0
        %836 = vmatpush1.msra.mxu0 %v751
        %837 = vmatprep.subr.mxu0 0.0
        %838 = vmatpush1.msra.mxu0 %v752
        %839 = vmatprep.subr.mxu0 0.0
        %840 = vmatpush1.msra.mxu0 %v753
        %841 = vmatprep.mubr.f32.mxu0 %v718
        %842 = vmatmul.mubr.f32.gmra.mrb[0].mxu0 %v716
        %v843 = vpop.f32.mrb[0].mxu0
        %v844 = vadd.f32 %v775, %v843
        %v845 = vpop.f32.mrb[0].mxu0
        %846 = vmatprep.mubr.f32.mxu0 %v719
        %847 = vmatmul.mubr.f32.gmra.mrb[0].mxu0 %v717
        %v848 = vpop.f32.mrb[0].mxu0
        %v849 = vadd.f32 %v775, %v848
        %v850 = vpop.f32.mrb[0].mxu0
        %851 = vdwg.mxu0
        %852 = vmatprep.subr.mxu0 0.0
        %853 = vmatpush1.msra.mxu0 %v754
        %854 = vmatprep.subr.mxu0 0.0
        %855 = vmatpush1.msra.mxu0 %v755
        %856 = vmatprep.subr.mxu0 0.0
        %857 = vmatpush1.msra.mxu0 %v756
        %858 = vmatprep.subr.mxu0 0.0
        %859 = vmatpush1.msra.mxu0 %v757
        %860 = vmatprep.subr.mxu0 0.0
        %861 = vmatpush1.msra.mxu0 %v758
        %862 = vmatprep.subr.mxu0 0.0
        %863 = vmatpush1.msra.mxu0 %v759
        %864 = vmatprep.subr.mxu0 0.0
        %865 = vmatpush1.msra.mxu0 %v760
        %866 = vmatprep.subr.mxu0 0.0
        %867 = vmatpush1.msra.mxu0 %v761
        %868 = vmatprep.subr.mxu0 0.0
        %869 = vmatpush1.msra.mxu0 %v762
        %870 = vmatprep.subr.mxu0 0.0
        %871 = vmatpush1.msra.mxu0 %v763
        %872 = vmatprep.subr.mxu0 0.0
        %873 = vmatpush1.msra.mxu0 %v764
        %874 = vmatprep.subr.mxu0 0.0
        %875 = vmatpush1.msra.mxu0 %v765
        %876 = vmatprep.subr.mxu0 0.0
        %877 = vmatpush1.msra.mxu0 %v766
        %878 = vmatprep.subr.mxu0 0.0
        %879 = vmatpush1.msra.mxu0 %v767
        %880 = vmatprep.subr.mxu0 0.0
        %881 = vmatpush1.msra.mxu0 %v768
        %882 = vmatprep.subr.mxu0 0.0
        %883 = vmatpush1.msra.mxu0 %v769
        %884 = vmatprep.subr.mxu0 0.0
        %885 = vmatpush1.msra.mxu0 0.0
        %886 = vmatprep.subr.mxu0 0.0
        %887 = vmatpush1.msra.mxu0 0.0
        %888 = vmatprep.subr.mxu0 0.0
        %889 = vmatpush1.msra.mxu0 0.0
        %890 = vmatprep.subr.mxu0 0.0
        %891 = vmatpush1.msra.mxu0 0.0
        %892 = vmatprep.subr.mxu0 0.0
        %893 = vmatpush1.msra.mxu0 0.0
        %894 = vmatprep.subr.mxu0 0.0
        %895 = vmatpush1.msra.mxu0 0.0
        %896 = vmatprep.subr.mxu0 0.0
        %897 = vmatpush1.msra.mxu0 0.0
        %898 = vmatprep.subr.mxu0 0.0
        %899 = vmatpush1.msra.mxu0 0.0
        %900 = vmatprep.subr.mxu0 0.0
        %901 = vmatpush1.msra.mxu0 0.0
        %902 = vmatprep.subr.mxu0 0.0
        %903 = vmatpush1.msra.mxu0 0.0
        %904 = vmatprep.subr.mxu0 0.0
        %905 = vmatpush1.msra.mxu0 0.0
        %906 = vmatprep.subr.mxu0 0.0
        %907 = vmatpush1.msra.mxu0 0.0
        %908 = vmatprep.subr.mxu0 0.0
        %909 = vmatpush1.msra.mxu0 0.0
        %910 = vmatprep.subr.mxu0 0.0
        %911 = vmatpush1.msra.mxu0 0.0
        %912 = vmatprep.subr.mxu0 0.0
        %913 = vmatpush1.msra.mxu0 0.0
        %914 = vmatprep.subr.mxu0 0.0
        %915 = vmatpush1.msra.mxu0 0.0
        %916 = vmatprep.mubr.f32.mxu0 0.0
        %917 = vmatmul.mubr.f32.gmra.mrb[0].mxu0 %v720
        %v918 = vpop.f32.mrb[0].mxu0
        %v919 = vadd.f32 %v844, %v918
        %v920 = vpop.f32.mrb[0].mxu0
        %921 = vmatprep.mubr.f32.mxu0 0.0
        %922 = vmatmul.mubr.f32.gmra.mrb[0].mxu0 %v721
        %v923 = vpop.f32.mrb[0].mxu0
        %v924 = vadd.f32 %v849, %v923
        %v925 = vpop.f32.mrb[0].mxu0
        %926 = vdwg.mxu0
        %v927 = vmax.f32 %v919, 0.0
        %v928 = vmax.f32 %v924, 0.0
        %929 = vadd.xlane.f32.xlu0 %v927
        %v930 = vpop.xlane.xlu0 %929
        %931 = vadd.xlane.f32.xlu0 %v928
        %v932 = vpop.xlane.xlu0 %931
        %v933 = vmul.f32 %v927, %v927
        %v934 = vmul.f32 %v928, %v928
        %935 = vadd.xlane.f32.xlu0 %v933
        %v936 = vpop.xlane.xlu0 %935
        %937 = vadd.xlane.f32.xlu0 %v934
        %v938 = vpop.xlane.xlu0 %937
        %v939 = vmul.f32 %v930, 0.03125
        %v940 = vmul.f32 %v932, 0.03125
        %v941 = vmul.f32 %v936, 0.03125
        %v942 = vmul.f32 %v938, 0.03125
        %v943 = vmul.f32 %v939, %v939
        %v944 = vmul.f32 %v940, %v940
        %v945 = vsub.f32 %v941, %v943
        %v946 = vsub.f32 %v942, %v944
        %v947 = vsub.f32 %v927, %v939
        %v948 = vsub.f32 %v928, %v940
        %v949 = vadd.f32 %v945, 1e-05
        %v950 = vadd.f32 %v946, 1e-05
        %v951 = vrsqrt.pop %v949
        %v952 = vrsqrt.pop %v950
        %v953 = vmul.f32 %v947, %v951
        %v954 = vmul.f32 %v948, %v952
        %v955 = vld [vmem:[%s7] sm:$0x1]
        %v957 = vlaneseq
        %v958 = vshrl.u32 %v957, 7
        %v959 = vsub.s32 0, %v958
        %v960 = vrot.slane %v955, %v959
        %v962 = vmul.f32 %v953, %v960
        %v963 = vmul.f32 %v954, %v960
        %v964 = vld [vmem:[%s8] sm:$0x1]
        %v966 = vlaneseq
        %v967 = vshrl.u32 %v966, 7
        %v968 = vsub.s32 0, %v967
        %v969 = vrot.slane %v964, %v968
        %v971 = vadd.f32 %v962, %v969
        %v972 = vadd.f32 %v963, %v969
        %v973 = vadd.f32 %v971, %v489
        %v974 = vadd.f32 %v972, %v494
        %975 = vst [vmem:[%s394] sm:$0xff] %v973
        %976 = vst [vmem:[%s394 + $0x8] sm:$0xff] %v974
        %s977 = sand.u32 %s230, 1
        %s978 = scalar_lea.sflag [#allocation5], %s977
        %s979 = sand.u32 %s230, 1
        %s980 = smul.addr %s979, 16
        %s981 = scalar_lea.vmem [#allocation11], %s980
        // Predicated region
        $region73: #{tpu_custom_call.1} parent=55 // pred_check
          %p982 = pneg %p240
        $region74: #{tpu_custom_call.1} parent=55 // pred_check_branch
          %984 = sbr.rel (%p982) target = $region76
        $region75: #{tpu_custom_call.1} parent=55 // pred_region
          %s986 = ssub.s32 256, 256
          %987 = vsyncadd %s978, %s986
          %s988 = smul.addr %s28, 2
          %s989 = smul.addr %s988, 128
          %s990 = scalar_lea.hbm %s9, %s989
          %s991 = sshll.u32 %s981, 4
          %s992 = int_to_ptr.vmem [resolvable:$true] %s991
          %997 = dma.vmem_to_hbm [thread:$0]  %s992, 256, %s990, %s978, 128, 128, 8
        $region76: #{tpu_custom_call.1} parent=55 // pred_fallthru
          _
      $region56: #{tpu_custom_call.1} parent=5 // pred_fallthru
        _
      %p998 = scmp.le.s32.totalorder 2, %s23
      // Predicated region
      $region77: #{tpu_custom_call.1} parent=5 // pred_check
        %p999 = pneg %p998
      $region78: #{tpu_custom_call.1} parent=5 // pred_check_branch
        %1001 = sbr.rel (%p999) target = $region80
      $region79: #{tpu_custom_call.1} parent=5 // pred_region
        %s1002 = ssub.s32 %s23, 2
        // Predicated region
        $region81: #{tpu_custom_call.1} parent=79 // pred_check
          %p1003 = pneg %p246
        $region82: #{tpu_custom_call.1} parent=79 // pred_check_branch
          %1005 = sbr.rel (%p1003) target = $region84
        $region83: #{tpu_custom_call.1} parent=79 // pred_region
          %s1006 = sand.u32 %s231, 1
          %s1007 = scalar_lea.sflag [#allocation5], %s1006
          %s1008 = sand.u32 %s231, 1
          %s1009 = smul.addr %s1008, 16
          %s1010 = scalar_lea.vmem [#allocation11], %s1009
          %1011 = dma.done %s1007, 256
        $region84: #{tpu_custom_call.1} parent=79 // pred_fallthru
          _
      $region80: #{tpu_custom_call.1} parent=5 // pred_fallthru
        _
    $region6: #{tpu_custom_call.1} parent=1 // loop_footer
      %s27 = sadd.s32 1, %s23
    $region7: #{tpu_custom_call.1} parent=1 // loop_footer_branch
      %22 = sbr.rel target = $region3
    $region8: #{tpu_custom_call.1} parent=1 // loop_exit
      _
    %1012 = vsyncpa [#allocation4], 1
    %s1013 = scalar_lea.sflag [#allocation4], 1
    %1014 = vsyncpa %s1013, 1
    %1015 = vsyncpa [#allocation7], 1
    %1016 = vsyncpa [#allocation10], 1
    %1017 = vsyncpa [#allocation5], 1
    %s1018 = scalar_lea.sflag [#allocation5], 1
    %1019 = vsyncpa %s1018, 1

</llo_original>
